<compile_context>
chip_gen: v7x
topology: tpu7x:2x2x1
jax: 0.10.0
libtpu: 0.0.40
codegen_flags: <defaults>
</compile_context>

<pallas_src>
import math

import jax
import jax.numpy as jnp
from jax.experimental import pallas as pl
from jax.experimental.pallas import tpu as pltpu


def _round_up(n, m):
    return ((n + m - 1) // m) * m


def _conv1x1_kernel(x_ref, w_ref, b_ref, o_ref):
    # x_ref: (Cin, TL)   w_ref: (Cout, Cin)   b_ref: (Cout, 1)   o_ref: (Cout, TL)
    y = jnp.dot(w_ref[...], x_ref[...], preferred_element_type=jnp.float32)
    o_ref[...] = (y + b_ref[...]).astype(o_ref.dtype)


def outconv_forward(x, w, b, *, max_tile_l=512):
    """PyTorch `outconv.forward`: Conv1d(in_ch, out_ch, kernel_size=1).

    x: (B, Cin, L) float32
    w: (Cout, Cin, 1) (PyTorch Conv1d weight layout)
    b: (Cout,)
    returns (B, Cout, L)
    """
    B, Cin, L = x.shape
    Cout, Cin_w, k = w.shape
    assert k == 1 and Cin_w == Cin, (w.shape, x.shape)

    w2 = w[:, :, 0]            # (Cout, Cin)
    b2 = b.reshape(Cout, 1)    # (Cout, 1)

    # Lane-dense tiling over the time axis: pad L to a multiple of 128 and pick
    # the largest 128-multiple tile (<= max_tile_l) that divides the padded length.
    Lp = _round_up(L, 128)
    tl = max(t for t in (512, 384, 256, 128) if t <= max(max_tile_l, 128) and Lp % t == 0)
    xp = jnp.pad(x, ((0, 0), (0, 0), (0, Lp - L))) if Lp > L else x

    out = pl.pallas_call(
        _conv1x1_kernel,
        grid=(B, Lp // tl),
        in_specs=[
            # activation tile: batch dim squeezed, full channel dim, lane-dense L tile
            pl.BlockSpec((None, Cin, tl), lambda bi, li: (bi, 0, li)),
            # weight / bias: constant small blocks
            pl.BlockSpec((Cout, Cin), lambda bi, li: (0, 0)),
            pl.BlockSpec((Cout, 1), lambda bi, li: (0, 0)),
        ],
        out_specs=pl.BlockSpec((None, Cout, tl), lambda bi, li: (bi, 0, li)),
        out_shape=jax.ShapeDtypeStruct((B, Cout, Lp), x.dtype),
        compiler_params=pltpu.CompilerParams(
            dimension_semantics=("parallel", "parallel")),
    )(xp, w2, b2)

    return out[:, :, :L] if Lp > L else out


if __name__ == "__main__":
    # Small shapes consistent with the module: outconv(in_ch=8, out_ch=3) on (B=2, 8, L=16).
    B, in_ch, out_ch, L = 2, 8, 3, 16

    key = jax.random.PRNGKey(0)
    kx, kw, kb = jax.random.split(key, 3)
    bound = 1.0 / math.sqrt(in_ch * 1)          # PyTorch Conv1d default init bound
    w = jax.random.uniform(kw, (out_ch, in_ch, 1), jnp.float32, -bound, bound)
    b = jax.random.uniform(kb, (out_ch,), jnp.float32, -bound, bound)
    x = jax.random.normal(kx, (B, in_ch, L), jnp.float32)

    y = jax.jit(outconv_forward)(x, w, b)
    y = jax.block_until_ready(y)

    # plain-JAX reference check (Conv1d with kernel_size=1 == pointwise matmul + bias)
    ref = jnp.einsum('oc,bcl->bol', w[:, :, 0], x) + b[None, :, None]
    assert y.shape == (B, out_ch, L), y.shape
    assert jnp.all(jnp.isfinite(y))
    assert jnp.allclose(y, ref, atol=1e-5, rtol=1e-5), float(jnp.max(jnp.abs(y - ref)))

    print("KERNEL_OK")
</pallas_src>

<mosaic_0001>
module attributes {stable_mosaic.version = 11 : i64} {
  func.func @_conv1x1_kernel(%arg0: i32, %arg1: i32, %arg2: memref<1x8x128xf32, #tpu.memory_space<vmem>>, %arg3: memref<3x8xf32, #tpu.memory_space<vmem>>, %arg4: memref<3x1xf32, #tpu.memory_space<vmem>>, %arg5: memref<1x3x128xf32, #tpu.memory_space<vmem>>) attributes {dimension_semantics = [#tpu.dimension_semantics<parallel>, #tpu.dimension_semantics<parallel>], iteration_bounds = array<i64: 2, 1>, scalar_prefetch = 0 : i64, scratch_operands = 0 : i64, tpu.core_type = #tpu.core_type<tc>, window_params = [{transform_indices = @transform_0, window_bounds = array<i64: 1, 8, 128>}, {pipeline_mode = #tpu.pipeline_mode<synchronous>, transform_indices = @transform_1, window_bounds = array<i64: 3, 8>}, {pipeline_mode = #tpu.pipeline_mode<synchronous>, transform_indices = @transform_2, window_bounds = array<i64: 3, 1>}, {transform_indices = @transform_3, window_bounds = array<i64: 1, 3, 128>}]} {
    %c0 = arith.constant 0 : index
    %c0_0 = arith.constant 0 : index
    %0 = vector.load %arg3[%c0, %c0_0] : memref<3x8xf32, #tpu.memory_space<vmem>>, vector<3x8xf32>
    %c0_1 = arith.constant 0 : index
    %c0_2 = arith.constant 0 : index
    %c0_3 = arith.constant 0 : index
    %1 = vector.load %arg2[%c0_1, %c0_2, %c0_3] : memref<1x8x128xf32, #tpu.memory_space<vmem>>, vector<1x8x128xf32>
    %2 = vector.shape_cast %1 : vector<1x8x128xf32> to vector<8x128xf32>
    %cst = arith.constant dense<0.000000e+00> : vector<3x128xf32>
    %3 = tpu.matmul %0, %2, %cst {dimension_numbers = #tpu.dot_dimension_numbers<[1], [0], [0], [1], [0, 0, 1, 1], [], []>} : vector<3x8xf32>, vector<8x128xf32>, vector<3x128xf32> -> vector<3x128xf32>
    %c0_4 = arith.constant 0 : index
    %c0_5 = arith.constant 0 : index
    %4 = vector.load %arg4[%c0_4, %c0_5] : memref<3x1xf32, #tpu.memory_space<vmem>>, vector<3x1xf32>
    %5 = vector.broadcast %4 : vector<3x1xf32> to vector<3x128xf32>
    %6 = arith.addf %3, %5 : vector<3x128xf32>
    %c0_6 = arith.constant 0 : index
    %c0_7 = arith.constant 0 : index
    %c0_8 = arith.constant 0 : index
    %7 = vector.load %arg5[%c0_6, %c0_7, %c0_8] : memref<1x3x128xf32, #tpu.memory_space<vmem>>, vector<1x3x128xf32>
    %8 = vector.shape_cast %7 : vector<1x3x128xf32> to vector<3x128xf32>
    %9 = vector.shape_cast %6 : vector<3x128xf32> to vector<1x3x128xf32>
    tpu.vector_store %arg5[%c0_6, %c0_7, %c0_8], %9 {strides = array<i32>} : memref<1x3x128xf32, #tpu.memory_space<vmem>>, vector<1x3x128xf32>,
    return
  }
  func.func @transform_0(%arg0: i32, %arg1: i32) -> (i32, i32, i32) {
    %c0_i32 = arith.constant 0 : i32
    %c0_i32_0 = arith.constant 0 : i32
    return %arg0, %c0_i32, %arg1 : i32, i32, i32
  }
  func.func @transform_1(%arg0: i32, %arg1: i32) -> (i32, i32) {
    %c0_i32 = arith.constant 0 : i32
    %c0_i32_0 = arith.constant 0 : i32
    %c0_i32_1 = arith.constant 0 : i32
    return %c0_i32, %c0_i32_0 : i32, i32
  }
  func.func @transform_2(%arg0: i32, %arg1: i32) -> (i32, i32) {
    %c0_i32 = arith.constant 0 : i32
    %c0_i32_0 = arith.constant 0 : i32
    %c0_i32_1 = arith.constant 0 : i32
    return %c0_i32, %c0_i32_0 : i32, i32
  }
  func.func @transform_3(%arg0: i32, %arg1: i32) -> (i32, i32, i32) {
    %c0_i32 = arith.constant 0 : i32
    %c0_i32_0 = arith.constant 0 : i32
    return %arg0, %c0_i32, %arg1 : i32, i32, i32
  }
}

</mosaic_0001>

<llo_original>
// kernel: outconv_forward.1
$region0: #{outconv_forward.1}
  #allocation0 [shape = 'u32[]', space=smem, size = 0x4, offset = 0x4, fixed_abs, tag = 'smem constant byte address 0x4 - core index']
  #allocation1 [shape = 'u32[144,128]{1,0:T(1,128)}', space=vmem, size = 0x12000, scoped, tag = 'internal scratch']
  %s0 = inlined_call_operand.vmem [shape: f32[2,8,128], index: 0, kind: input, shape index: {}]
  %s1 = inlined_call_operand.vmem [shape: f32[3,8], index: 1, kind: input, shape index: {}]
  %s2 = inlined_call_operand.vmem [shape: f32[3,1], index: 2, kind: input, shape index: {}]
  %s3 = inlined_call_operand.vmem [shape: f32[2,3,128], index: 3, kind: output, shape index: {}]
  %s4 = sld [smem:[#allocation0]]
  $region45: #{outconv_forward.1} parent=0
    _
  %s6 = ssub.s32 1, %s4
  %s7 = scalar_select 0, %s6, %s4
  loop: start=0, step=1, limit=4
  $region2: #{outconv_forward.1} parent=0 // loop_pre_header
    _
  $region3: #{outconv_forward.1} parent=0 // loop_header
    %s9 = sphi 0, %s13
    %p10 = scmp.ge.s32.totalorder %s9, 4
    %s16 = sphi 0, %s28
    %s17 = sphi 0, %s24
    %s18 = sphi 0, %s16
    %s19 = sphi 0, %s17
    %s20 = sphi 0, %s18
    %s21 = sphi 0, %s19
    %s33 = sphi 0, %s35
    %s36 = sphi 0, %s33
    %s37 = sphi 0, %s36
    %s53 = sphi 0, %s37
    %s57 = sphi 0, %s57
    %s59 = sphi 0, %s57
    %s60 = sphi 0, %s59
    %s74 = sphi 0, %s60
    %s78 = sphi 0, %s78
    %s80 = sphi 0, %s78
    %s81 = sphi 0, %s80
    %s95 = sphi 0, %s81
    %s103 = sphi 0, %s105
    %s106 = sphi 0, %s103
    %s107 = sphi 0, %s106
    %s123 = sphi 0, %s107
  $region4: #{outconv_forward.1} parent=0 // loop_header_branch
    %12 = sbr.rel (%p10) target = $region8
  $region5: #{outconv_forward.1} parent=0 // loop_body
    %s14 = ssub.s32 %s9, 1
    %s15 = ssub.s32 %s9, 2
    %s22 = sadd.s32 1, %s17
    %p23 = scmp.ge.s32.totalorder %s22, 1
    %s24 = scalar_select %p23, 0, %s22
    %s25 = sadd.s32 1, %s16
    %s26 = scalar_select %p23, %s25, %s16
    %p27 = scmp.ge.s32.totalorder %s26, 2
    %s28 = scalar_select %p27, 0, %s26
    %s29 = ssub.s32 %s16, %s28
    %s30 = ssub.s32 %s17, %s24
    %s31 = sor.u32 %s29, %s30
    %p32 = scmp.eq.s32.totalorder %s31, 0
    %s34 = sadd.s32 %s33, 1
    %s35 = scalar_select %p32, %s33, %s34
    %p38 = pneg %p32
    %p39 = scmp.eq.s32.totalorder %s9, 1
    %p40 = por %p38, %p39
    %p41 = scmp.ne.s32.totalorder %s33, %s36
    %p42 = scmp.eq.s32.totalorder %s9, 0
    %p43 = por %p41, %p42
    %p44 = scmp.ne.s32.totalorder %s33, %s36
    %p45 = scmp.eq.s32.totalorder %s14, 1
    %p46 = por %p44, %p45
    %p47 = scmp.ne.s32.totalorder %s36, %s37
    %p48 = scmp.eq.s32.totalorder %s14, 0
    %p49 = por %p47, %p48
    %p50 = scmp.ne.s32.totalorder %s36, %s37
    %p51 = scmp.eq.s32.totalorder %s15, 1
    %p52 = por %p50, %p51
    %p54 = scmp.ne.s32.totalorder %s37, %s53
    %p55 = scmp.eq.s32.totalorder %s15, 0
    %p56 = por %p54, %p55
    %s58 = sadd.s32 %s57, 1
    %p61 = scmp.eq.s32.totalorder %s9, 1
    %p62 = scmp.ne.s32.totalorder %s57, %s59
    %p63 = scmp.eq.s32.totalorder %s9, 0
    %p64 = por %p62, %p63
    %p65 = scmp.ne.s32.totalorder %s57, %s59
    %p66 = scmp.eq.s32.totalorder %s14, 1
    %p67 = por %p65, %p66
    %p68 = scmp.ne.s32.totalorder %s59, %s60
    %p69 = scmp.eq.s32.totalorder %s14, 0
    %p70 = por %p68, %p69
    %p71 = scmp.ne.s32.totalorder %s59, %s60
    %p72 = scmp.eq.s32.totalorder %s15, 1
    %p73 = por %p71, %p72
    %p75 = scmp.ne.s32.totalorder %s60, %s74
    %p76 = scmp.eq.s32.totalorder %s15, 0
    %p77 = por %p75, %p76
    %s79 = sadd.s32 %s78, 1
    %p82 = scmp.eq.s32.totalorder %s9, 1
    %p83 = scmp.ne.s32.totalorder %s78, %s80
    %p84 = scmp.eq.s32.totalorder %s9, 0
    %p85 = por %p83, %p84
    %p86 = scmp.ne.s32.totalorder %s78, %s80
    %p87 = scmp.eq.s32.totalorder %s14, 1
    %p88 = por %p86, %p87
    %p89 = scmp.ne.s32.totalorder %s80, %s81
    %p90 = scmp.eq.s32.totalorder %s14, 0
    %p91 = por %p89, %p90
    %p92 = scmp.ne.s32.totalorder %s80, %s81
    %p93 = scmp.eq.s32.totalorder %s15, 1
    %p94 = por %p92, %p93
    %p96 = scmp.ne.s32.totalorder %s81, %s95
    %p97 = scmp.eq.s32.totalorder %s15, 0
    %p98 = por %p96, %p97
    %s99 = ssub.s32 %s16, %s28
    %s100 = ssub.s32 %s17, %s24
    %s101 = sor.u32 %s99, %s100
    %p102 = scmp.eq.s32.totalorder %s101, 0
    %s104 = sadd.s32 %s103, 1
    %s105 = scalar_select %p102, %s103, %s104
    %p108 = pneg %p102
    %p109 = scmp.eq.s32.totalorder %s9, 1
    %p110 = por %p108, %p109
    %p111 = scmp.ne.s32.totalorder %s103, %s106
    %p112 = scmp.eq.s32.totalorder %s9, 0
    %p113 = por %p111, %p112
    %p114 = scmp.ne.s32.totalorder %s103, %s106
    %p115 = scmp.eq.s32.totalorder %s14, 1
    %p116 = por %p114, %p115
    %p117 = scmp.ne.s32.totalorder %s106, %s107
    %p118 = scmp.eq.s32.totalorder %s14, 0
    %p119 = por %p117, %p118
    %p120 = scmp.ne.s32.totalorder %s106, %s107
    %p121 = scmp.eq.s32.totalorder %s15, 1
    %p122 = por %p120, %p121
    %p124 = scmp.ne.s32.totalorder %s107, %s123
    %p125 = scmp.eq.s32.totalorder %s15, 0
    %p126 = por %p124, %p125
    %p127 = scmp.le.s32.totalorder 1, %s9
    %p128 = scmp.lt.s32.totalorder %s9, 3
    %p129 = pnand %p127, %p128
    %p130 = pneg %p129
    // Predicated region
    $region9: #{outconv_forward.1} parent=5 // pred_check
      _
    $region10: #{outconv_forward.1} parent=5 // pred_check_branch
      %132 = sbr.rel (%p129) target = $region12
    $region11: #{outconv_forward.1} parent=5 // pred_region
      %s133 = ssub.s32 %s9, 1
      // Predicated region
      $region13: #{outconv_forward.1} parent=11 // pred_check
        %p134 = pneg %p70
      $region14: #{outconv_forward.1} parent=11 // pred_check_branch
        %136 = sbr.rel (%p134) target = $region16
      $region15: #{outconv_forward.1} parent=11 // pred_region
        _
      $region16: #{outconv_forward.1} parent=11 // pred_fallthru
        _
      // Predicated region
      $region17: #{outconv_forward.1} parent=11 // pred_check
        %p137 = pneg %p91
      $region18: #{outconv_forward.1} parent=11 // pred_check_branch
        %139 = sbr.rel (%p137) target = $region20
      $region19: #{outconv_forward.1} parent=11 // pred_region
        _
      $region20: #{outconv_forward.1} parent=11 // pred_fallthru
        _
    $region12: #{outconv_forward.1} parent=5 // pred_fallthru
      _
    %p140 = scmp.lt.s32.totalorder %s9, 2
    // Predicated region
    $region21: #{outconv_forward.1} parent=5 // pred_check
      %p141 = pneg %p140
    $region22: #{outconv_forward.1} parent=5 // pred_check_branch
      %143 = sbr.rel (%p141) target = $region24
    $region23: #{outconv_forward.1} parent=5 // pred_region
      // Predicated region
      $region25: #{outconv_forward.1} parent=23 // pred_check
        %p144 = pneg %p43
      $region26: #{outconv_forward.1} parent=23 // pred_check_branch
        %146 = sbr.rel (%p144) target = $region28
      $region27: #{outconv_forward.1} parent=23 // pred_region
        %p147 = scmp.lt.s32.totalorder %s16, 1
        %s148 = scalar_select %p147, %s16, 1
        %p149 = scmp.lt.s32.totalorder %s17, 0
        %s150 = scalar_select %p149, %s17, 0
        %s151 = sadd.s32 %s150, %s148
        %s152 = smul.addr %s151, 8
        %s153 = scalar_lea.vmem %s0, %s152
      $region28: #{outconv_forward.1} parent=23 // pred_fallthru
        _
    $region24: #{outconv_forward.1} parent=5 // pred_fallthru
      _
    %p154 = scmp.le.s32.totalorder 1, %s9
    %p155 = scmp.lt.s32.totalorder %s9, 3
    %p156 = pnand %p154, %p155
    %p157 = pneg %p156
    // Predicated region
    $region29: #{outconv_forward.1} parent=5 // pred_check
      _
    $region30: #{outconv_forward.1} parent=5 // pred_check_branch
      %159 = sbr.rel (%p156) target = $region32
    $region31: #{outconv_forward.1} parent=5 // pred_region
      %s160 = ssub.s32 %s9, 1
      %p161 = scmp.lt.s32.totalorder %s18, 1
      %s162 = scalar_select %p161, %s18, 1
      %p163 = scmp.lt.s32.totalorder %s19, 0
      %s164 = scalar_select %p163, %s19, 0
      %s165 = sadd.s32 %s164, %s162
      %s166 = smul.addr %s165, 8
      %s167 = scalar_lea.vmem %s0, %s166
      %p168 = pneg %p49
      %p169 = pneg %p46
      %p170 = pneg %p70
      %p171 = pneg %p67
      %p172 = pneg %p91
      %p173 = pneg %p88
      %p174 = pneg %p119
      %p175 = pneg %p116
      %p176 = scmp.lt.s32.totalorder %s18, 1
      %s177 = scalar_select %p176, %s18, 1
      %p178 = scmp.lt.s32.totalorder %s19, 0
      %s179 = scalar_select %p178, %s19, 0
      %s180 = sadd.s32 %s179, %s177
      %s181 = smul.addr %s180, 4
      %s182 = scalar_lea.vmem %s3, %s181
      %p183 = scmp.lt.s32.totalorder %s18, 1
      %s184 = scalar_select %p183, %s18, 1
      %p185 = scmp.lt.s32.totalorder %s19, 0
      %s186 = scalar_select %p185, %s19, 0
      %s187 = sadd.s32 %s186, %s184
      %s188 = smul.addr %s187, 8
      %s189 = scalar_lea.vmem %s0, %s188
      %p190 = scmp.lt.s32.totalorder %s18, 1
      %s191 = scalar_select %p190, %s18, 1
      %p192 = scmp.lt.s32.totalorder %s19, 0
      %s193 = scalar_select %p192, %s19, 0
      %s194 = sadd.s32 %s193, %s191
      %s195 = smul.addr %s194, 4
      %s196 = scalar_lea.vmem %s3, %s195
      %v197 = vld [vmem:[%s1] sm:$0x7]
      %v198 = vld [vmem:[%s189] sm:$0xff]
      %v199 = vld [vmem:[%s2] sm:$0x7]
      %201 = vset.pattern.permute.xlu0 0
      %202 = vperm.xlu0 %201, %v199
      %v203 = vpop.permute.xlu0 %202
      %vm205 = vcmask 64512
      %v207 = vsel %vm205, %v197, 0
      %209 = vmatprep.subr.mxu0 0.0
      %210 = vmatpush1.msra.mxu0 %v198
      %211 = vmatprep.subr.mxu0 0.0
      %212 = vmatpush1.msra.mxu0 0.0
      %213 = vmatprep.subr.mxu0 0.0
      %214 = vmatpush1.msra.mxu0 0.0
      %215 = vmatprep.subr.mxu0 0.0
      %216 = vmatpush1.msra.mxu0 0.0
      %217 = vmatprep.subr.mxu0 0.0
      %218 = vmatpush1.msra.mxu0 0.0
      %219 = vmatprep.subr.mxu0 0.0
      %220 = vmatpush1.msra.mxu0 0.0
      %221 = vmatprep.subr.mxu0 0.0
      %222 = vmatpush1.msra.mxu0 0.0
      %223 = vmatprep.subr.mxu0 0.0
      %224 = vmatpush1.msra.mxu0 0.0
      %225 = vmatprep.subr.mxu0 0.0
      %226 = vmatpush1.msra.mxu0 0.0
      %227 = vmatprep.subr.mxu0 0.0
      %228 = vmatpush1.msra.mxu0 0.0
      %229 = vmatprep.subr.mxu0 0.0
      %230 = vmatpush1.msra.mxu0 0.0
      %231 = vmatprep.subr.mxu0 0.0
      %232 = vmatpush1.msra.mxu0 0.0
      %233 = vmatprep.subr.mxu0 0.0
      %234 = vmatpush1.msra.mxu0 0.0
      %235 = vmatprep.subr.mxu0 0.0
      %236 = vmatpush1.msra.mxu0 0.0
      %237 = vmatprep.subr.mxu0 0.0
      %238 = vmatpush1.msra.mxu0 0.0
      %239 = vmatprep.subr.mxu0 0.0
      %240 = vmatpush1.msra.mxu0 0.0
      %241 = vmatprep.subr.mxu0 0.0
      %242 = vmatpush1.msra.mxu0 0.0
      %243 = vmatprep.subr.mxu0 0.0
      %244 = vmatpush1.msra.mxu0 0.0
      %245 = vmatprep.subr.mxu0 0.0
      %246 = vmatpush1.msra.mxu0 0.0
      %247 = vmatprep.subr.mxu0 0.0
      %248 = vmatpush1.msra.mxu0 0.0
      %249 = vmatprep.subr.mxu0 0.0
      %250 = vmatpush1.msra.mxu0 0.0
      %251 = vmatprep.subr.mxu0 0.0
      %252 = vmatpush1.msra.mxu0 0.0
      %253 = vmatprep.subr.mxu0 0.0
      %254 = vmatpush1.msra.mxu0 0.0
      %255 = vmatprep.subr.mxu0 0.0
      %256 = vmatpush1.msra.mxu0 0.0
      %257 = vmatprep.subr.mxu0 0.0
      %258 = vmatpush1.msra.mxu0 0.0
      %259 = vmatprep.subr.mxu0 0.0
      %260 = vmatpush1.msra.mxu0 0.0
      %261 = vmatprep.subr.mxu0 0.0
      %262 = vmatpush1.msra.mxu0 0.0
      %263 = vmatprep.subr.mxu0 0.0
      %264 = vmatpush1.msra.mxu0 0.0
      %265 = vmatprep.subr.mxu0 0.0
      %266 = vmatpush1.msra.mxu0 0.0
      %267 = vmatprep.subr.mxu0 0.0
      %268 = vmatpush1.msra.mxu0 0.0
      %269 = vmatprep.subr.mxu0 0.0
      %270 = vmatpush1.msra.mxu0 0.0
      %271 = vmatprep.subr.mxu0 0.0
      %272 = vmatpush1.msra.mxu0 0.0
      %273 = vmatprep.mubr.f32.mxu0 0.0
      %274 = vmatmul.mubr.f32.gmra.mrb[0].mxu0 %v207
      %v275 = vpop.f32.mrb[0].mxu0
      %v276 = vadd.f32 %v203, %v275
      %v277 = vpop.f32.mrb[0].mxu0
      %278 = vdwg.mxu0
      %279 = vst [vmem:[%s196] sm:$0x7] %v276
      %p280 = scmp.lt.s32.totalorder %s18, 1
      %s281 = scalar_select %p280, %s18, 1
      %p282 = scmp.lt.s32.totalorder %s19, 0
      %s283 = scalar_select %p282, %s19, 0
      %s284 = sadd.s32 %s283, %s281
      %s285 = smul.addr %s284, 4
      %s286 = scalar_lea.vmem %s3, %s285
      // Predicated region
      $region33: #{outconv_forward.1} parent=31 // pred_check
        %p287 = pneg %p116
      $region34: #{outconv_forward.1} parent=31 // pred_check_branch
        %289 = sbr.rel (%p287) target = $region36
      $region35: #{outconv_forward.1} parent=31 // pred_region
        _
      $region36: #{outconv_forward.1} parent=31 // pred_fallthru
        _
    $region32: #{outconv_forward.1} parent=5 // pred_fallthru
      _
    %p290 = scmp.le.s32.totalorder 2, %s9
    // Predicated region
    $region37: #{outconv_forward.1} parent=5 // pred_check
      %p291 = pneg %p290
    $region38: #{outconv_forward.1} parent=5 // pred_check_branch
      %293 = sbr.rel (%p291) target = $region40
    $region39: #{outconv_forward.1} parent=5 // pred_region
      %s294 = ssub.s32 %s9, 2
      // Predicated region
      $region41: #{outconv_forward.1} parent=39 // pred_check
        %p295 = pneg %p122
      $region42: #{outconv_forward.1} parent=39 // pred_check_branch
        %297 = sbr.rel (%p295) target = $region44
      $region43: #{outconv_forward.1} parent=39 // pred_region
        %p298 = scmp.lt.s32.totalorder %s20, 1
        %s299 = scalar_select %p298, %s20, 1
        %p300 = scmp.lt.s32.totalorder %s21, 0
        %s301 = scalar_select %p300, %s21, 0
        %s302 = sadd.s32 %s301, %s299
        %s303 = smul.addr %s302, 4
        %s304 = scalar_lea.vmem %s3, %s303
      $region44: #{outconv_forward.1} parent=39 // pred_fallthru
        _
    $region40: #{outconv_forward.1} parent=5 // pred_fallthru
      _
  $region6: #{outconv_forward.1} parent=0 // loop_footer
    %s13 = sadd.s32 1, %s9
  $region7: #{outconv_forward.1} parent=0 // loop_footer_branch
    %8 = sbr.rel target = $region3
  $region8: #{outconv_forward.1} parent=0 // loop_exit
    _

</llo_original>
